<compile_context>
chip_gen: v6e
topology: v6e:2x2x1
jax: 0.10.0
libtpu: 0.0.40
codegen_flags: <defaults>
</compile_context>

<pallas_src>
import numpy as np
import jax
import jax.numpy as jnp
from jax import lax
from jax.experimental import pallas as pl
from jax.experimental.pallas import tpu as pltpu


def _vertex_conv_kernel(qkv_ref, m_ref, x_ref, o_ref):
    q = qkv_ref[0]                   # [P, TE]  query of member j (j on sublanes)
    k = qkv_ref[1]                   # [P, TE]  key   of member l
    v = qkv_ref[2]                   # [P, TE]  value of member l
    m = m_ref[...]                   # [P, TE]  member mask (0/1)
    P, TE = m.shape

    # Exact unmasked max over l of scores[l, j, e] = q[j,e] * k[l,e]:
    #   max_l q*k[l] = q * (max_l k) if q >= 0 else q * (min_l k).
    # Padding member slots reuse vertex 0, so this is finite; it upper-bounds
    # the masked max, keeping exp(score - mx) <= 1 (softmax unchanged).
    kmax = jnp.max(k, axis=0, keepdims=True)                 # [1, TE]
    kmin = jnp.min(k, axis=0, keepdims=True)                 # [1, TE]
    mx = jnp.where(q >= jnp.float32(0.0), q * kmax, q * kmin)  # [P_j, TE]

    # Fused masked softmax + weighted-v accumulation over l.
    # Live set: a handful of [P, TE] slabs; no [P, P, TE] temporaries.
    # Padding members are zeroed by the 0/1 mask multiply; the l == j diagonal
    # is included here and subtracted exactly once below.
    num = jnp.zeros_like(q)                                  # sum_l e_l * v[l]
    den = jnp.zeros_like(q)                                  # sum_l e_l
    for l in range(P):                                       # static, P small
        e_l = jnp.exp(q * k[l:l + 1, :] - mx) * m[l:l + 1, :]   # [P_j, TE]
        den = den + e_l
        num = num + e_l * v[l:l + 1, :]
    diag = jnp.exp(q * k - mx) * m                           # l == j term
    den = den - diag
    num = num - diag * v

    # di[j,e] = tanh(sum_l a[l,j,e] * v[l,e]); exact division (the approx
    # reciprocal was the source of the previous tolerance failure).
    den = jnp.maximum(den, jnp.float32(1e-30))               # padded/singleton cols
    coef = m * jnp.tanh(num / den)                           # [P_j, TE]; pads -> 0

    # out[d,e] = sum_j coef[j,e] * feats[member_j, d].
    # Stream x slab-by-slab from the ref; only one [D, TE] accumulator lives.
    acc = coef[0:1, :] * x_ref[0]                            # [D, TE]
    for l in range(1, P):
        acc = acc + coef[l:l + 1, :] * x_ref[l]
    o_ref[...] = acc


def vertex_conv(feats, edge_idx, edge_mask, w_stack, b_stack, *, edge_tile=512):
    """feats: [N, D] f32; edge_idx/edge_mask: [E, P]; w_stack: [3, D]; b_stack: [3].

    edge_tile must be a multiple of 128 (lane width). It is clamped for small
    E; for large edge counts 512-1024 amortizes the per-step pipeline overhead
    (keep E_pad/edge_tile >= 2 so both v7x TensorCores get work).
    """
    N, D = feats.shape
    E, P = edge_idx.shape
    assert edge_tile % 128 == 0

    # Clamp the tile for small edge counts, then pad E to a tile multiple.
    tile = min(edge_tile, pl.cdiv(E, 128) * 128)
    E_pad = pl.cdiv(E, tile) * tile
    pad = E_pad - E
    idx_p = jnp.pad(edge_idx, ((0, pad), (0, 0)))          # padded rows -> idx 0
    mask_p = jnp.pad(edge_mask, ((0, pad), (0, 0)))        # padded rows -> mask 0

    # One high-precision MXU matmul over *vertices* for the three scalar
    # projections (Linear(dim_in, 1) x3), then gather scalars per member slot.
    proj = jnp.dot(feats, w_stack.T,
                   precision=lax.Precision.HIGHEST,
                   preferred_element_type=jnp.float32) + b_stack      # [N, 3]
    qkv = jnp.transpose(proj[idx_p], (2, 1, 0))                       # [3, P, E_pad]

    # Member feature gather in edges-on-lanes layout.
    x = jnp.transpose(feats[idx_p], (1, 2, 0))                        # [P, D, E_pad]
    m = jnp.transpose(mask_p, (1, 0))                                 # [P, E_pad]

    # Advisory cost estimate (memory-bound on the x stream).
    flops = int(E_pad) * (P * (6 * P + 2 * D) + 16 * P)
    transcendentals = int(E_pad) * P * (P + 2)
    bytes_accessed = 4 * int(E_pad) * (P * D + 4 * P + D) + 4 * N * (D + 3)

    out_t = pl.pallas_call(
        _vertex_conv_kernel,
        out_shape=jax.ShapeDtypeStruct((D, E_pad), jnp.float32),
        grid=(E_pad // tile,),
        in_specs=[
            pl.BlockSpec((3, P, tile), lambda i: (0, 0, i)),   # qkv
            pl.BlockSpec((P, tile), lambda i: (0, i)),         # mask
            pl.BlockSpec((P, D, tile), lambda i: (0, 0, i)),   # x
        ],
        out_specs=pl.BlockSpec((D, tile), lambda i: (0, i)),   # lane-dense store
        compiler_params=pltpu.CompilerParams(
            dimension_semantics=("parallel",)),   # independent edge tiles
        cost_estimate=pl.CostEstimate(flops=flops,
                                      transcendentals=transcendentals,
                                      bytes_accessed=bytes_accessed),
    )(qkv, m, x)

    out = jnp.transpose(out_t, (1, 0))[:E]                            # [E, D]

    # Singleton-edge fallback in the wrapper (reference outputs feats[edge_i]);
    # fuses with the transpose.  Only meaningful while E <= N (as in PyTorch).
    n_fe = min(E, N)
    fe = jnp.pad(feats[:n_fe], ((0, E - n_fe), (0, 0)))               # [E, D]
    npoint = jnp.sum(edge_mask, axis=1)                               # [E]
    out = jnp.where(npoint[:, None] == jnp.float32(1.0), fe, out)
    return out


def _reference(feats, edge_dict, wq, bq, wk, bk, wv, bv):
    """Numpy transcription of the PyTorch forward (loop semantics)."""
    feats = np.asarray(feats)
    D = feats.shape[1]
    out = []
    for i, edge in enumerate(edge_dict):
        n = len(edge)
        if n == 1:
            out.append(np.array(feats[i], np.float32))      # note: feats[i]
        else:
            acc = np.zeros(D, np.float32)
            for j in range(n):
                vj = edge[j]
                others = [edge[l] for l in range(n) if l != j]
                ei = feats[vj] @ wq + bq
                ej = feats[others] @ wk + bk
                eij = ei * ej
                ex = np.exp(eij - eij.max())
                aij = ex / ex.sum()
                vv = feats[others] @ wv + bv
                di = np.tanh(np.sum(aij * vv))
                acc = acc + di * feats[vj]
            out.append(acc)
    return np.stack(out).astype(np.float32)


def _make_edge_dict(E, N, P):
    """Deterministic synthetic ragged edge_dict (includes singleton edges)."""
    edge_dict = []
    for i in range(E):
        if i % 5 == 2:
            edge_dict.append([(i * 7 + 3) % N])                      # singleton
        else:
            npt = 2 + (i % 5)                                        # 2..6 <= P
            edge_dict.append([i % N] + [((i * 3) + 7 * t + 1) % N
                                        for t in range(1, npt)])
    assert max(len(e) for e in edge_dict) <= P
    return edge_dict


def _pack(edge_dict, E, P):
    edge_idx_np = np.zeros((E, P), np.int32)
    edge_mask_np = np.zeros((E, P), np.float32)
    for i, e in enumerate(edge_dict):
        edge_idx_np[i, :len(e)] = e
        edge_mask_np[i, :len(e)] = 1.0
    return edge_idx_np, edge_mask_np


def _run_case(key, N, D, E, P, edge_tile):
    edge_dict = _make_edge_dict(E, N, P)
    edge_idx_np, edge_mask_np = _pack(edge_dict, E, P)

    kf, kw, kb = jax.random.split(key, 3)
    feats = jax.random.normal(kf, (N, D), dtype=jnp.float32)
    scale = 1.0 / np.sqrt(D)
    w_stack = jax.random.uniform(kw, (3, D), minval=-scale, maxval=scale,
                                 dtype=jnp.float32)   # rows: w_q, w_k, w_v
    b_stack = jax.random.uniform(kb, (3,), minval=-scale, maxval=scale,
                                 dtype=jnp.float32)   # b_q, b_k, b_v

    out = vertex_conv(feats, jnp.asarray(edge_idx_np), jnp.asarray(edge_mask_np),
                      w_stack, b_stack, edge_tile=edge_tile)
    out = jax.block_until_ready(out)

    w_np = np.asarray(w_stack)
    b_np = np.asarray(b_stack)
    ref = _reference(np.asarray(feats), edge_dict,
                     w_np[0], float(b_np[0]),
                     w_np[1], float(b_np[1]),
                     w_np[2], float(b_np[2]))
    np.testing.assert_allclose(np.asarray(out), ref, rtol=2e-3, atol=2e-3)


if __name__ == "__main__":
    key = jax.random.PRNGKey(0)
    k1, k2 = jax.random.split(key)

    # Small single-tile case (vertices=16, dim=32, edges=16, max members=8).
    _run_case(k1, N=16, D=32, E=16, P=8, edge_tile=512)

    # Multi-tile case (grid = 2 edge tiles) to exercise the pipelined grid.
    _run_case(k2, N=256, D=32, E=200, P=8, edge_tile=128)

    print("KERNEL_OK")
</pallas_src>

<mosaic_0001>
module attributes {stable_mosaic.version = 11 : i64} {
  func.func @_vertex_conv_kernel(%arg0: i32, %arg1: memref<3x8x128xf32, #tpu.memory_space<vmem>>, %arg2: memref<8x128xf32, #tpu.memory_space<vmem>>, %arg3: memref<8x32x128xf32, #tpu.memory_space<vmem>>, %arg4: memref<32x128xf32, #tpu.memory_space<vmem>>) attributes {dimension_semantics = [#tpu.dimension_semantics<parallel>], iteration_bounds = array<i64: 1>, scalar_prefetch = 0 : i64, scratch_operands = 0 : i64, tpu.core_type = #tpu.core_type<tc>, window_params = [{transform_indices = @transform_0, window_bounds = array<i64: 3, 8, 128>}, {transform_indices = @transform_1, window_bounds = array<i64: 8, 128>}, {transform_indices = @transform_2, window_bounds = array<i64: 8, 32, 128>}, {transform_indices = @transform_3, window_bounds = array<i64: 32, 128>}]} {
    %c0 = arith.constant 0 : index
    %c0_0 = arith.constant 0 : index
    %c0_1 = arith.constant 0 : index
    %0 = vector.load %arg1[%c0, %c0_0, %c0_1] : memref<3x8x128xf32, #tpu.memory_space<vmem>>, vector<1x8x128xf32>
    %1 = vector.shape_cast %0 : vector<1x8x128xf32> to vector<8x128xf32>
    %c1 = arith.constant 1 : index
    %c0_2 = arith.constant 0 : index
    %c0_3 = arith.constant 0 : index
    %2 = vector.load %arg1[%c1, %c0_2, %c0_3] : memref<3x8x128xf32, #tpu.memory_space<vmem>>, vector<1x8x128xf32>
    %3 = vector.shape_cast %2 : vector<1x8x128xf32> to vector<8x128xf32>
    %c2 = arith.constant 2 : index
    %c0_4 = arith.constant 0 : index
    %c0_5 = arith.constant 0 : index
    %4 = vector.load %arg1[%c2, %c0_4, %c0_5] : memref<3x8x128xf32, #tpu.memory_space<vmem>>, vector<1x8x128xf32>
    %5 = vector.shape_cast %4 : vector<1x8x128xf32> to vector<8x128xf32>
    %c0_6 = arith.constant 0 : index
    %c0_7 = arith.constant 0 : index
    %6 = vector.load %arg2[%c0_6, %c0_7] : memref<8x128xf32, #tpu.memory_space<vmem>>, vector<8x128xf32>
    %cst = arith.constant dense<0xFF800000> : vector<128xf32>
    %7 = vector.multi_reduction <maximumf>, %3, %cst [0] : vector<8x128xf32> to vector<128xf32>
    %8 = vector.shape_cast %7 : vector<128xf32> to vector<1x128xf32>
    %cst_8 = arith.constant dense<0x7F800000> : vector<128xf32>
    %9 = vector.multi_reduction <minimumf>, %3, %cst_8 [0] : vector<8x128xf32> to vector<128xf32>
    %10 = vector.shape_cast %9 : vector<128xf32> to vector<1x128xf32>
    %cst_9 = arith.constant 0.000000e+00 : f32
    %11 = vector.broadcast %cst_9 : f32 to vector<8x128xf32>
    %12 = arith.cmpf oge, %1, %11 : vector<8x128xf32>
    %13 = vector.broadcast %8 : vector<1x128xf32> to vector<8x128xf32>
    %14 = arith.mulf %1, %13 : vector<8x128xf32>
    %15 = vector.broadcast %10 : vector<1x128xf32> to vector<8x128xf32>
    %16 = arith.mulf %1, %15 : vector<8x128xf32>
    %17 = arith.select %12, %14, %16 : vector<8x128xi1>, vector<8x128xf32>
    %cst_10 = arith.constant 0.000000e+00 : f32
    %18 = vector.broadcast %cst_10 : f32 to vector<8x128xf32>
    %cst_11 = arith.constant 0.000000e+00 : f32
    %19 = vector.broadcast %cst_11 : f32 to vector<8x128xf32>
    %20 = vector.extract_strided_slice %3 {offsets = [0, 0], sizes = [1, 128], strides = [1, 1]} : vector<8x128xf32> to vector<1x128xf32>
    %21 = vector.broadcast %20 : vector<1x128xf32> to vector<8x128xf32>
    %22 = arith.mulf %1, %21 : vector<8x128xf32>
    %23 = arith.subf %22, %17 : vector<8x128xf32>
    %24 = math.exp %23 : vector<8x128xf32>
    %25 = vector.extract_strided_slice %6 {offsets = [0, 0], sizes = [1, 128], strides = [1, 1]} : vector<8x128xf32> to vector<1x128xf32>
    %26 = vector.broadcast %25 : vector<1x128xf32> to vector<8x128xf32>
    %27 = arith.mulf %24, %26 : vector<8x128xf32>
    %28 = arith.addf %19, %27 : vector<8x128xf32>
    %29 = vector.extract_strided_slice %5 {offsets = [0, 0], sizes = [1, 128], strides = [1, 1]} : vector<8x128xf32> to vector<1x128xf32>
    %30 = vector.broadcast %29 : vector<1x128xf32> to vector<8x128xf32>
    %31 = arith.mulf %27, %30 : vector<8x128xf32>
    %32 = arith.addf %18, %31 : vector<8x128xf32>
    %33 = vector.extract_strided_slice %3 {offsets = [1, 0], sizes = [1, 128], strides = [1, 1]} : vector<8x128xf32> to vector<1x128xf32>
    %34 = vector.broadcast %33 : vector<1x128xf32> to vector<8x128xf32>
    %35 = arith.mulf %1, %34 : vector<8x128xf32>
    %36 = arith.subf %35, %17 : vector<8x128xf32>
    %37 = math.exp %36 : vector<8x128xf32>
    %38 = vector.extract_strided_slice %6 {offsets = [1, 0], sizes = [1, 128], strides = [1, 1]} : vector<8x128xf32> to vector<1x128xf32>
    %39 = vector.broadcast %38 : vector<1x128xf32> to vector<8x128xf32>
    %40 = arith.mulf %37, %39 : vector<8x128xf32>
    %41 = arith.addf %28, %40 : vector<8x128xf32>
    %42 = vector.extract_strided_slice %5 {offsets = [1, 0], sizes = [1, 128], strides = [1, 1]} : vector<8x128xf32> to vector<1x128xf32>
    %43 = vector.broadcast %42 : vector<1x128xf32> to vector<8x128xf32>
    %44 = arith.mulf %40, %43 : vector<8x128xf32>
    %45 = arith.addf %32, %44 : vector<8x128xf32>
    %46 = vector.extract_strided_slice %3 {offsets = [2, 0], sizes = [1, 128], strides = [1, 1]} : vector<8x128xf32> to vector<1x128xf32>
    %47 = vector.broadcast %46 : vector<1x128xf32> to vector<8x128xf32>
    %48 = arith.mulf %1, %47 : vector<8x128xf32>
    %49 = arith.subf %48, %17 : vector<8x128xf32>
    %50 = math.exp %49 : vector<8x128xf32>
    %51 = vector.extract_strided_slice %6 {offsets = [2, 0], sizes = [1, 128], strides = [1, 1]} : vector<8x128xf32> to vector<1x128xf32>
    %52 = vector.broadcast %51 : vector<1x128xf32> to vector<8x128xf32>
    %53 = arith.mulf %50, %52 : vector<8x128xf32>
    %54 = arith.addf %41, %53 : vector<8x128xf32>
    %55 = vector.extract_strided_slice %5 {offsets = [2, 0], sizes = [1, 128], strides = [1, 1]} : vector<8x128xf32> to vector<1x128xf32>
    %56 = vector.broadcast %55 : vector<1x128xf32> to vector<8x128xf32>
    %57 = arith.mulf %53, %56 : vector<8x128xf32>
    %58 = arith.addf %45, %57 : vector<8x128xf32>
    %59 = vector.extract_strided_slice %3 {offsets = [3, 0], sizes = [1, 128], strides = [1, 1]} : vector<8x128xf32> to vector<1x128xf32>
    %60 = vector.broadcast %59 : vector<1x128xf32> to vector<8x128xf32>
    %61 = arith.mulf %1, %60 : vector<8x128xf32>
    %62 = arith.subf %61, %17 : vector<8x128xf32>
    %63 = math.exp %62 : vector<8x128xf32>
    %64 = vector.extract_strided_slice %6 {offsets = [3, 0], sizes = [1, 128], strides = [1, 1]} : vector<8x128xf32> to vector<1x128xf32>
    %65 = vector.broadcast %64 : vector<1x128xf32> to vector<8x128xf32>
    %66 = arith.mulf %63, %65 : vector<8x128xf32>
    %67 = arith.addf %54, %66 : vector<8x128xf32>
    %68 = vector.extract_strided_slice %5 {offsets = [3, 0], sizes = [1, 128], strides = [1, 1]} : vector<8x128xf32> to vector<1x128xf32>
    %69 = vector.broadcast %68 : vector<1x128xf32> to vector<8x128xf32>
    %70 = arith.mulf %66, %69 : vector<8x128xf32>
    %71 = arith.addf %58, %70 : vector<8x128xf32>
    %72 = vector.extract_strided_slice %3 {offsets = [4, 0], sizes = [1, 128], strides = [1, 1]} : vector<8x128xf32> to vector<1x128xf32>
    %73 = vector.broadcast %72 : vector<1x128xf32> to vector<8x128xf32>
    %74 = arith.mulf %1, %73 : vector<8x128xf32>
    %75 = arith.subf %74, %17 : vector<8x128xf32>
    %76 = math.exp %75 : vector<8x128xf32>
    %77 = vector.extract_strided_slice %6 {offsets = [4, 0], sizes = [1, 128], strides = [1, 1]} : vector<8x128xf32> to vector<1x128xf32>
    %78 = vector.broadcast %77 : vector<1x128xf32> to vector<8x128xf32>
    %79 = arith.mulf %76, %78 : vector<8x128xf32>
    %80 = arith.addf %67, %79 : vector<8x128xf32>
    %81 = vector.extract_strided_slice %5 {offsets = [4, 0], sizes = [1, 128], strides = [1, 1]} : vector<8x128xf32> to vector<1x128xf32>
    %82 = vector.broadcast %81 : vector<1x128xf32> to vector<8x128xf32>
    %83 = arith.mulf %79, %82 : vector<8x128xf32>
    %84 = arith.addf %71, %83 : vector<8x128xf32>
    %85 = vector.extract_strided_slice %3 {offsets = [5, 0], sizes = [1, 128], strides = [1, 1]} : vector<8x128xf32> to vector<1x128xf32>
    %86 = vector.broadcast %85 : vector<1x128xf32> to vector<8x128xf32>
    %87 = arith.mulf %1, %86 : vector<8x128xf32>
    %88 = arith.subf %87, %17 : vector<8x128xf32>
    %89 = math.exp %88 : vector<8x128xf32>
    %90 = vector.extract_strided_slice %6 {offsets = [5, 0], sizes = [1, 128], strides = [1, 1]} : vector<8x128xf32> to vector<1x128xf32>
    %91 = vector.broadcast %90 : vector<1x128xf32> to vector<8x128xf32>
    %92 = arith.mulf %89, %91 : vector<8x128xf32>
    %93 = arith.addf %80, %92 : vector<8x128xf32>
    %94 = vector.extract_strided_slice %5 {offsets = [5, 0], sizes = [1, 128], strides = [1, 1]} : vector<8x128xf32> to vector<1x128xf32>
    %95 = vector.broadcast %94 : vector<1x128xf32> to vector<8x128xf32>
    %96 = arith.mulf %92, %95 : vector<8x128xf32>
    %97 = arith.addf %84, %96 : vector<8x128xf32>
    %98 = vector.extract_strided_slice %3 {offsets = [6, 0], sizes = [1, 128], strides = [1, 1]} : vector<8x128xf32> to vector<1x128xf32>
    %99 = vector.broadcast %98 : vector<1x128xf32> to vector<8x128xf32>
    %100 = arith.mulf %1, %99 : vector<8x128xf32>
    %101 = arith.subf %100, %17 : vector<8x128xf32>
    %102 = math.exp %101 : vector<8x128xf32>
    %103 = vector.extract_strided_slice %6 {offsets = [6, 0], sizes = [1, 128], strides = [1, 1]} : vector<8x128xf32> to vector<1x128xf32>
    %104 = vector.broadcast %103 : vector<1x128xf32> to vector<8x128xf32>
    %105 = arith.mulf %102, %104 : vector<8x128xf32>
    %106 = arith.addf %93, %105 : vector<8x128xf32>
    %107 = vector.extract_strided_slice %5 {offsets = [6, 0], sizes = [1, 128], strides = [1, 1]} : vector<8x128xf32> to vector<1x128xf32>
    %108 = vector.broadcast %107 : vector<1x128xf32> to vector<8x128xf32>
    %109 = arith.mulf %105, %108 : vector<8x128xf32>
    %110 = arith.addf %97, %109 : vector<8x128xf32>
    %111 = vector.extract_strided_slice %3 {offsets = [7, 0], sizes = [1, 128], strides = [1, 1]} : vector<8x128xf32> to vector<1x128xf32>
    %112 = vector.broadcast %111 : vector<1x128xf32> to vector<8x128xf32>
    %113 = arith.mulf %1, %112 : vector<8x128xf32>
    %114 = arith.subf %113, %17 : vector<8x128xf32>
    %115 = math.exp %114 : vector<8x128xf32>
    %116 = vector.extract_strided_slice %6 {offsets = [7, 0], sizes = [1, 128], strides = [1, 1]} : vector<8x128xf32> to vector<1x128xf32>
    %117 = vector.broadcast %116 : vector<1x128xf32> to vector<8x128xf32>
    %118 = arith.mulf %115, %117 : vector<8x128xf32>
    %119 = arith.addf %106, %118 : vector<8x128xf32>
    %120 = vector.extract_strided_slice %5 {offsets = [7, 0], sizes = [1, 128], strides = [1, 1]} : vector<8x128xf32> to vector<1x128xf32>
    %121 = vector.broadcast %120 : vector<1x128xf32> to vector<8x128xf32>
    %122 = arith.mulf %118, %121 : vector<8x128xf32>
    %123 = arith.addf %110, %122 : vector<8x128xf32>
    %124 = arith.mulf %1, %3 : vector<8x128xf32>
    %125 = arith.subf %124, %17 : vector<8x128xf32>
    %126 = math.exp %125 : vector<8x128xf32>
    %127 = arith.mulf %126, %6 : vector<8x128xf32>
    %128 = arith.subf %119, %127 : vector<8x128xf32>
    %129 = arith.mulf %127, %5 : vector<8x128xf32>
    %130 = arith.subf %123, %129 : vector<8x128xf32>
    %cst_12 = arith.constant 1.000000e-30 : f32
    %131 = vector.broadcast %cst_12 : f32 to vector<8x128xf32>
    %132 = arith.maximumf %128, %131 : vector<8x128xf32>
    %133 = arith.divf %130, %132 : vector<8x128xf32>
    %134 = math.tanh %133 : vector<8x128xf32>
    %135 = arith.mulf %6, %134 : vector<8x128xf32>
    %136 = vector.extract_strided_slice %135 {offsets = [0, 0], sizes = [1, 128], strides = [1, 1]} : vector<8x128xf32> to vector<1x128xf32>
    %c0_13 = arith.constant 0 : index
    %c0_14 = arith.constant 0 : index
    %c0_15 = arith.constant 0 : index
    %137 = vector.load %arg3[%c0_13, %c0_14, %c0_15] : memref<8x32x128xf32, #tpu.memory_space<vmem>>, vector<1x32x128xf32>
    %138 = vector.shape_cast %137 : vector<1x32x128xf32> to vector<32x128xf32>
    %139 = vector.broadcast %136 : vector<1x128xf32> to vector<32x128xf32>
    %140 = arith.mulf %139, %138 : vector<32x128xf32>
    %141 = vector.extract_strided_slice %135 {offsets = [1, 0], sizes = [1, 128], strides = [1, 1]} : vector<8x128xf32> to vector<1x128xf32>
    %c1_16 = arith.constant 1 : index
    %c0_17 = arith.constant 0 : index
    %c0_18 = arith.constant 0 : index
    %142 = vector.load %arg3[%c1_16, %c0_17, %c0_18] : memref<8x32x128xf32, #tpu.memory_space<vmem>>, vector<1x32x128xf32>
    %143 = vector.shape_cast %142 : vector<1x32x128xf32> to vector<32x128xf32>
    %144 = vector.broadcast %141 : vector<1x128xf32> to vector<32x128xf32>
    %145 = arith.mulf %144, %143 : vector<32x128xf32>
    %146 = arith.addf %140, %145 : vector<32x128xf32>
    %147 = vector.extract_strided_slice %135 {offsets = [2, 0], sizes = [1, 128], strides = [1, 1]} : vector<8x128xf32> to vector<1x128xf32>
    %c2_19 = arith.constant 2 : index
    %c0_20 = arith.constant 0 : index
    %c0_21 = arith.constant 0 : index
    %148 = vector.load %arg3[%c2_19, %c0_20, %c0_21] : memref<8x32x128xf32, #tpu.memory_space<vmem>>, vector<1x32x128xf32>
    %149 = vector.shape_cast %148 : vector<1x32x128xf32> to vector<32x128xf32>
    %150 = vector.broadcast %147 : vector<1x128xf32> to vector<32x128xf32>
    %151 = arith.mulf %150, %149 : vector<32x128xf32>
    %152 = arith.addf %146, %151 : vector<32x128xf32>
    %153 = vector.extract_strided_slice %135 {offsets = [3, 0], sizes = [1, 128], strides = [1, 1]} : vector<8x128xf32> to vector<1x128xf32>
    %c3 = arith.constant 3 : index
    %c0_22 = arith.constant 0 : index
    %c0_23 = arith.constant 0 : index
    %154 = vector.load %arg3[%c3, %c0_22, %c0_23] : memref<8x32x128xf32, #tpu.memory_space<vmem>>, vector<1x32x128xf32>
    %155 = vector.shape_cast %154 : vector<1x32x128xf32> to vector<32x128xf32>
    %156 = vector.broadcast %153 : vector<1x128xf32> to vector<32x128xf32>
    %157 = arith.mulf %156, %155 : vector<32x128xf32>
    %158 = arith.addf %152, %157 : vector<32x128xf32>
    %159 = vector.extract_strided_slice %135 {offsets = [4, 0], sizes = [1, 128], strides = [1, 1]} : vector<8x128xf32> to vector<1x128xf32>
    %c4 = arith.constant 4 : index
    %c0_24 = arith.constant 0 : index
    %c0_25 = arith.constant 0 : index
    %160 = vector.load %arg3[%c4, %c0_24, %c0_25] : memref<8x32x128xf32, #tpu.memory_space<vmem>>, vector<1x32x128xf32>
    %161 = vector.shape_cast %160 : vector<1x32x128xf32> to vector<32x128xf32>
    %162 = vector.broadcast %159 : vector<1x128xf32> to vector<32x128xf32>
    %163 = arith.mulf %162, %161 : vector<32x128xf32>
    %164 = arith.addf %158, %163 : vector<32x128xf32>
    %165 = vector.extract_strided_slice %135 {offsets = [5, 0], sizes = [1, 128], strides = [1, 1]} : vector<8x128xf32> to vector<1x128xf32>
    %c5 = arith.constant 5 : index
    %c0_26 = arith.constant 0 : index
    %c0_27 = arith.constant 0 : index
    %166 = vector.load %arg3[%c5, %c0_26, %c0_27] : memref<8x32x128xf32, #tpu.memory_space<vmem>>, vector<1x32x128xf32>
    %167 = vector.shape_cast %166 : vector<1x32x128xf32> to vector<32x128xf32>
    %168 = vector.broadcast %165 : vector<1x128xf32> to vector<32x128xf32>
    %169 = arith.mulf %168, %167 : vector<32x128xf32>
    %170 = arith.addf %164, %169 : vector<32x128xf32>
    %171 = vector.extract_strided_slice %135 {offsets = [6, 0], sizes = [1, 128], strides = [1, 1]} : vector<8x128xf32> to vector<1x128xf32>
    %c6 = arith.constant 6 : index
    %c0_28 = arith.constant 0 : index
    %c0_29 = arith.constant 0 : index
    %172 = vector.load %arg3[%c6, %c0_28, %c0_29] : memref<8x32x128xf32, #tpu.memory_space<vmem>>, vector<1x32x128xf32>
    %173 = vector.shape_cast %172 : vector<1x32x128xf32> to vector<32x128xf32>
    %174 = vector.broadcast %171 : vector<1x128xf32> to vector<32x128xf32>
    %175 = arith.mulf %174, %173 : vector<32x128xf32>
    %176 = arith.addf %170, %175 : vector<32x128xf32>
    %177 = vector.extract_strided_slice %135 {offsets = [7, 0], sizes = [1, 128], strides = [1, 1]} : vector<8x128xf32> to vector<1x128xf32>
    %c7 = arith.constant 7 : index
    %c0_30 = arith.constant 0 : index
    %c0_31 = arith.constant 0 : index
    %178 = vector.load %arg3[%c7, %c0_30, %c0_31] : memref<8x32x128xf32, #tpu.memory_space<vmem>>, vector<1x32x128xf32>
    %179 = vector.shape_cast %178 : vector<1x32x128xf32> to vector<32x128xf32>
    %180 = vector.broadcast %177 : vector<1x128xf32> to vector<32x128xf32>
    %181 = arith.mulf %180, %179 : vector<32x128xf32>
    %182 = arith.addf %176, %181 : vector<32x128xf32>
    %c0_32 = arith.constant 0 : index
    %c0_33 = arith.constant 0 : index
    %183 = vector.load %arg4[%c0_32, %c0_33] : memref<32x128xf32, #tpu.memory_space<vmem>>, vector<32x128xf32>
    tpu.vector_store %arg4[%c0_32, %c0_33], %182 {strides = array<i32>} : memref<32x128xf32, #tpu.memory_space<vmem>>, vector<32x128xf32>,
    return
  }
  func.func @transform_0(%arg0: i32) -> (i32, i32, i32) {
    %c0_i32 = arith.constant 0 : i32
    %c0_i32_0 = arith.constant 0 : i32
    %c0_i32_1 = arith.constant 0 : i32
    return %c0_i32, %c0_i32_0, %arg0 : i32, i32, i32
  }
  func.func @transform_1(%arg0: i32) -> (i32, i32) {
    %c0_i32 = arith.constant 0 : i32
    %c0_i32_0 = arith.constant 0 : i32
    return %c0_i32, %arg0 : i32, i32
  }
  func.func @transform_2(%arg0: i32) -> (i32, i32, i32) {
    %c0_i32 = arith.constant 0 : i32
    %c0_i32_0 = arith.constant 0 : i32
    %c0_i32_1 = arith.constant 0 : i32
    return %c0_i32, %c0_i32_0, %arg0 : i32, i32, i32
  }
  func.func @transform_3(%arg0: i32) -> (i32, i32) {
    %c0_i32 = arith.constant 0 : i32
    %c0_i32_0 = arith.constant 0 : i32
    return %c0_i32, %arg0 : i32, i32
  }
}

</mosaic_0001>

<llo_original>
// kernel: tpu_custom_call.1
$region0: #{tpu_custom_call.1}
  #allocation0 [shape = 'u32[]', space=smem, size = 0x4, offset = 0x4, fixed_abs, tag = 'smem constant byte address 0x4 - core index']
  #allocation1 [shape = 'u32[144,128]{1,0:T(1,128)}', space=vmem, size = 0x12000, scoped, tag = 'internal scratch']
  %s0 = inlined_call_operand.hbm [shape: f32[3,8,128], index: 0, kind: input, shape index: {}]
  %s1 = inlined_call_operand.hbm [shape: f32[8,128], index: 1, kind: input, shape index: {}]
  %s2 = inlined_call_operand.hbm [shape: f32[8,32,128], index: 2, kind: input, shape index: {}]
  %s3 = inlined_call_operand.hbm [shape: f32[32,128], index: 3, kind: output, shape index: {}]
  %s4 = sld [smem:[#allocation0]]
  $region34: #{tpu_custom_call.1} parent=0
    _
  %s6 = ssub.s32 1, %s4
  %s7 = scalar_select 0, %s6, %s4
  $region1: #{tpu_custom_call.1} parent=0
    #allocation2 [shape = 'u8[12288]{0}', space=vmem, size = 0x3000, scoped, tag = 'input window, operand 0, single buffered']
    #allocation3 [shape = 's32[1]{0}', space=sflag, size = 0x4, scoped, tag = 'scoped memory for tpu_custom_call.1']
    #allocation4 [shape = 's32[1]{0}', space=sflag, size = 0x4, scoped, tag = 'scoped memory for tpu_custom_call.1']
    #allocation5 [shape = 'u8[4096]{0}', space=vmem, size = 0x1000, scoped, tag = 'input window, operand 1, single buffered']
    #allocation6 [shape = 's32[1]{0}', space=sflag, size = 0x4, scoped, tag = 'scoped memory for tpu_custom_call.1']
    #allocation7 [shape = 'u8[131072]{0}', space=vmem, size = 0x20000, scoped, tag = 'input window, operand 2, single buffered']
    #allocation8 [shape = 'u8[16384]{0}', space=vmem, size = 0x4000, scoped, tag = 'output window, operand 0, single buffered']
    %8 = vsyncpa [#allocation3], 0
    %9 = vsyncpa [#allocation6], 0
    %10 = vsyncpa [#allocation4], 0
    // Predicated region
    $region2: #{tpu_custom_call.1} parent=1 // pred_check
      _
    $region3: #{tpu_custom_call.1} parent=1 // pred_check_branch
      %12 = sbr.rel (0) target = $region5
    $region4: #{tpu_custom_call.1} parent=1 // pred_region
      %s14 = ssub.s32 384, 384
      %15 = vsyncadd [#allocation3], %s14
      %s16 = sshll.u32 [#allocation2], 4
      %s17 = int_to_ptr.vmem [resolvable:$true] %s16
      %22 = dma.hbm_to_vmem [thread:$0]  %s0, 384, %s17, [#allocation3], 128, 128, 8
    $region5: #{tpu_custom_call.1} parent=1 // pred_fallthru
      _
    // Predicated region
    $region6: #{tpu_custom_call.1} parent=1 // pred_check
      _
    $region7: #{tpu_custom_call.1} parent=1 // pred_check_branch
      %24 = sbr.rel (0) target = $region9
    $region8: #{tpu_custom_call.1} parent=1 // pred_region
      %s26 = ssub.s32 128, 128
      %27 = vsyncadd [#allocation6], %s26
      %s29 = sshll.u32 [#allocation5], 4
      %s30 = int_to_ptr.vmem [resolvable:$true] %s29
      %32 = dma.hbm_to_vmem [thread:$0]  %s1, 128, %s30, [#allocation6]
    $region9: #{tpu_custom_call.1} parent=1 // pred_fallthru
      _
    // Predicated region
    $region10: #{tpu_custom_call.1} parent=1 // pred_check
      _
    $region11: #{tpu_custom_call.1} parent=1 // pred_check_branch
      %34 = sbr.rel (0) target = $region13
    $region12: #{tpu_custom_call.1} parent=1 // pred_region
      %s36 = ssub.s32 4096, 4096
      %37 = vsyncadd [#allocation6], %s36
      %s38 = sshll.u32 [#allocation7], 4
      %s39 = int_to_ptr.vmem [resolvable:$true] %s38
      %44 = dma.hbm_to_vmem [thread:$0]  %s2, 4096, %s39, [#allocation6], 128, 128, 8
    $region13: #{tpu_custom_call.1} parent=1 // pred_fallthru
      _
    // Predicated region
    $region14: #{tpu_custom_call.1} parent=1 // pred_check
      _
    $region15: #{tpu_custom_call.1} parent=1 // pred_check_branch
      %46 = sbr.rel (0) target = $region17
    $region16: #{tpu_custom_call.1} parent=1 // pred_region
      %47 = dma.done [#allocation3], 384
    $region17: #{tpu_custom_call.1} parent=1 // pred_fallthru
      _
    // Predicated region
    $region18: #{tpu_custom_call.1} parent=1 // pred_check
      _
    $region19: #{tpu_custom_call.1} parent=1 // pred_check_branch
      %49 = sbr.rel (0) target = $region21
    $region20: #{tpu_custom_call.1} parent=1 // pred_region
      %50 = dma.done [#allocation6], 128
    $region21: #{tpu_custom_call.1} parent=1 // pred_fallthru
      _
    // Predicated region
    $region22: #{tpu_custom_call.1} parent=1 // pred_check
      _
    $region23: #{tpu_custom_call.1} parent=1 // pred_check_branch
      %52 = sbr.rel (0) target = $region25
    $region24: #{tpu_custom_call.1} parent=1 // pred_region
      %53 = dma.done [#allocation6], 4096
    $region25: #{tpu_custom_call.1} parent=1 // pred_fallthru
      _
    %v54 = vld [vmem:[#allocation2] sm:$0xff]
    %s55 = scalar_lea.vmem [#allocation2], 8
    %v56 = vld [vmem:[%s55] sm:$0xff]
    %s57 = scalar_lea.vmem [#allocation2], 16
    %v58 = vld [vmem:[%s57] sm:$0xff]
    %v59 = vld [vmem:[#allocation5] sm:$0xff]
    %v60 = vrot.slane %v56, 4
    %v61 = vmax.f32 %v56, %v60
    %v62 = vrot.slane %v61, 2
    %v63 = vmax.f32 %v61, %v62
    %v64 = vrot.slane %v63, 1
    %v65 = vmax.f32 %v63, %v64
    %v66 = vrot.slane %v56, 4
    %v67 = vmin.f32 %v56, %v66
    %v68 = vrot.slane %v67, 2
    %v69 = vmin.f32 %v67, %v68
    %v70 = vrot.slane %v69, 1
    %v71 = vmin.f32 %v69, %v70
    %vm72 = vcmp.ge.f32.partialorder %v54, 0.0
    %v73 = vmul.f32 %v54, %v65
    %v74 = vmul.f32 %v54, %v71
    %v75 = vsel %vm72, %v73, %v74
    %v76 = vlaneseq
    %v77 = vshrl.u32 %v76, 7
    %v78 = vsub.s32 0, %v77
    %v79 = vrot.slane %v56, %v78
    %v80 = vmul.f32 %v54, %v79
    %v81 = vsub.f32 %v80, %v75
    %v82 = vmul.f32 %v81, 1.442695
    %v83 = vpow.pop %v82
    %v84 = vlaneseq
    %v85 = vshrl.u32 %v84, 7
    %v86 = vsub.s32 0, %v85
    %v87 = vrot.slane %v59, %v86
    %v88 = vmul.f32 %v83, %v87
    %v89 = vadd.f32 %v88, 0.0
    %v90 = vlaneseq
    %v91 = vshrl.u32 %v90, 7
    %v92 = vsub.s32 0, %v91
    %v93 = vrot.slane %v58, %v92
    %v94 = vmul.f32 %v88, %v93
    %v95 = vadd.f32 %v94, 0.0
    %v96 = vlaneseq
    %v97 = vshrl.u32 %v96, 7
    %v98 = vsub.s32 1, %v97
    %v99 = vrot.slane %v56, %v98
    %v100 = vmul.f32 %v54, %v99
    %v101 = vsub.f32 %v100, %v75
    %v102 = vmul.f32 %v101, 1.442695
    %v103 = vpow.pop %v102
    %v104 = vlaneseq
    %v105 = vshrl.u32 %v104, 7
    %v106 = vsub.s32 1, %v105
    %v107 = vrot.slane %v59, %v106
    %v108 = vmul.f32 %v103, %v107
    %v109 = vadd.f32 %v89, %v108
    %v110 = vlaneseq
    %v111 = vshrl.u32 %v110, 7
    %v112 = vsub.s32 1, %v111
    %v113 = vrot.slane %v58, %v112
    %v114 = vmul.f32 %v108, %v113
    %v115 = vadd.f32 %v95, %v114
    %v116 = vlaneseq
    %v117 = vshrl.u32 %v116, 7
    %v118 = vsub.s32 2, %v117
    %v119 = vrot.slane %v56, %v118
    %v120 = vmul.f32 %v54, %v119
    %v121 = vsub.f32 %v120, %v75
    %v122 = vmul.f32 %v121, 1.442695
    %v123 = vpow.pop %v122
    %v124 = vlaneseq
    %v125 = vshrl.u32 %v124, 7
    %v126 = vsub.s32 2, %v125
    %v127 = vrot.slane %v59, %v126
    %v128 = vmul.f32 %v123, %v127
    %v129 = vadd.f32 %v109, %v128
    %v130 = vlaneseq
    %v131 = vshrl.u32 %v130, 7
    %v132 = vsub.s32 2, %v131
    %v133 = vrot.slane %v58, %v132
    %v134 = vmul.f32 %v128, %v133
    %v135 = vadd.f32 %v115, %v134
    %v136 = vlaneseq
    %v137 = vshrl.u32 %v136, 7
    %v138 = vsub.s32 3, %v137
    %v139 = vrot.slane %v56, %v138
    %v140 = vmul.f32 %v54, %v139
    %v141 = vsub.f32 %v140, %v75
    %v142 = vmul.f32 %v141, 1.442695
    %v143 = vpow.pop %v142
    %v144 = vlaneseq
    %v145 = vshrl.u32 %v144, 7
    %v146 = vsub.s32 3, %v145
    %v147 = vrot.slane %v59, %v146
    %v148 = vmul.f32 %v143, %v147
    %v149 = vadd.f32 %v129, %v148
    %v150 = vlaneseq
    %v151 = vshrl.u32 %v150, 7
    %v152 = vsub.s32 3, %v151
    %v153 = vrot.slane %v58, %v152
    %v154 = vmul.f32 %v148, %v153
    %v155 = vadd.f32 %v135, %v154
    %v156 = vlaneseq
    %v157 = vshrl.u32 %v156, 7
    %v158 = vsub.s32 4, %v157
    %v159 = vrot.slane %v56, %v158
    %v160 = vmul.f32 %v54, %v159
    %v161 = vsub.f32 %v160, %v75
    %v162 = vmul.f32 %v161, 1.442695
    %v163 = vpow.pop %v162
    %v164 = vlaneseq
    %v165 = vshrl.u32 %v164, 7
    %v166 = vsub.s32 4, %v165
    %v167 = vrot.slane %v59, %v166
    %v168 = vmul.f32 %v163, %v167
    %v169 = vadd.f32 %v149, %v168
    %v170 = vlaneseq
    %v171 = vshrl.u32 %v170, 7
    %v172 = vsub.s32 4, %v171
    %v173 = vrot.slane %v58, %v172
    %v174 = vmul.f32 %v168, %v173
    %v175 = vadd.f32 %v155, %v174
    %v176 = vlaneseq
    %v177 = vshrl.u32 %v176, 7
    %v178 = vsub.s32 5, %v177
    %v179 = vrot.slane %v56, %v178
    %v180 = vmul.f32 %v54, %v179
    %v181 = vsub.f32 %v180, %v75
    %v182 = vmul.f32 %v181, 1.442695
    %v183 = vpow.pop %v182
    %v184 = vlaneseq
    %v185 = vshrl.u32 %v184, 7
    %v186 = vsub.s32 5, %v185
    %v187 = vrot.slane %v59, %v186
    %v188 = vmul.f32 %v183, %v187
    %v189 = vadd.f32 %v169, %v188
    %v190 = vlaneseq
    %v191 = vshrl.u32 %v190, 7
    %v192 = vsub.s32 5, %v191
    %v193 = vrot.slane %v58, %v192
    %v194 = vmul.f32 %v188, %v193
    %v195 = vadd.f32 %v175, %v194
    %v196 = vlaneseq
    %v197 = vshrl.u32 %v196, 7
    %v198 = vsub.s32 6, %v197
    %v199 = vrot.slane %v56, %v198
    %v200 = vmul.f32 %v54, %v199
    %v201 = vsub.f32 %v200, %v75
    %v202 = vmul.f32 %v201, 1.442695
    %v203 = vpow.pop %v202
    %v204 = vlaneseq
    %v205 = vshrl.u32 %v204, 7
    %v206 = vsub.s32 6, %v205
    %v207 = vrot.slane %v59, %v206
    %v208 = vmul.f32 %v203, %v207
    %v209 = vadd.f32 %v189, %v208
    %v210 = vlaneseq
    %v211 = vshrl.u32 %v210, 7
    %v212 = vsub.s32 6, %v211
    %v213 = vrot.slane %v58, %v212
    %v214 = vmul.f32 %v208, %v213
    %v215 = vadd.f32 %v195, %v214
    %v216 = vlaneseq
    %v217 = vshrl.u32 %v216, 7
    %v218 = vsub.s32 7, %v217
    %v219 = vrot.slane %v56, %v218
    %v220 = vmul.f32 %v54, %v219
    %v221 = vsub.f32 %v220, %v75
    %v222 = vmul.f32 %v221, 1.442695
    %v223 = vpow.pop %v222
    %v224 = vlaneseq
    %v225 = vshrl.u32 %v224, 7
    %v226 = vsub.s32 7, %v225
    %v227 = vrot.slane %v59, %v226
    %v228 = vmul.f32 %v223, %v227
    %v229 = vadd.f32 %v209, %v228
    %v230 = vlaneseq
    %v231 = vshrl.u32 %v230, 7
    %v232 = vsub.s32 7, %v231
    %v233 = vrot.slane %v58, %v232
    %v234 = vmul.f32 %v228, %v233
    %v235 = vadd.f32 %v215, %v234
    %v236 = vmul.f32 %v54, %v56
    %v237 = vsub.f32 %v236, %v75
    %v238 = vmul.f32 %v237, 1.442695
    %v239 = vpow.pop %v238
    %v240 = vmul.f32 %v239, %v59
    %v241 = vsub.f32 %v229, %v240
    %v242 = vmul.f32 %v240, %v58
    %v243 = vsub.f32 %v235, %v242
    %v244 = vmax.f32 %v241, 1e-30
    %v245 = vrcp.pop %v244
    %v246 = vmul.f32 %v243, %v245
    %v247 = vtanh.pop %v246
    %v248 = vmul.f32 %v59, %v247
    %v249 = vld [vmem:[#allocation7] sm:$0xff]
    %v250 = vld [vmem:[#allocation7 + $0x8] sm:$0xff]
    %v251 = vld [vmem:[#allocation7 + $0x10] sm:$0xff]
    %v252 = vld [vmem:[#allocation7 + $0x18] sm:$0xff]
    %v253 = vlaneseq
    %v254 = vshrl.u32 %v253, 7
    %v255 = vsub.s32 0, %v254
    %v256 = vrot.slane %v248, %v255
    %v257 = vmul.f32 %v256, %v249
    %v258 = vmul.f32 %v256, %v250
    %v259 = vmul.f32 %v256, %v251
    %v260 = vmul.f32 %v256, %v252
    %s261 = scalar_lea.vmem [#allocation7], 32
    %v262 = vld [vmem:[%s261] sm:$0xff]
    %v263 = vld [vmem:[%s261 + $0x8] sm:$0xff]
    %v264 = vld [vmem:[%s261 + $0x10] sm:$0xff]
    %v265 = vld [vmem:[%s261 + $0x18] sm:$0xff]
    %v266 = vlaneseq
    %v267 = vshrl.u32 %v266, 7
    %v268 = vsub.s32 1, %v267
    %v269 = vrot.slane %v248, %v268
    %v270 = vmul.f32 %v269, %v262
    %v271 = vmul.f32 %v269, %v263
    %v272 = vmul.f32 %v269, %v264
    %v273 = vmul.f32 %v269, %v265
    %v274 = vadd.f32 %v257, %v270
    %v275 = vadd.f32 %v258, %v271
    %v276 = vadd.f32 %v259, %v272
    %v277 = vadd.f32 %v260, %v273
    %s278 = scalar_lea.vmem [#allocation7], 64
    %v279 = vld [vmem:[%s278] sm:$0xff]
    %v280 = vld [vmem:[%s278 + $0x8] sm:$0xff]
    %v281 = vld [vmem:[%s278 + $0x10] sm:$0xff]
    %v282 = vld [vmem:[%s278 + $0x18] sm:$0xff]
    %v283 = vlaneseq
    %v284 = vshrl.u32 %v283, 7
    %v285 = vsub.s32 2, %v284
    %v286 = vrot.slane %v248, %v285
    %v287 = vmul.f32 %v286, %v279
    %v288 = vmul.f32 %v286, %v280
    %v289 = vmul.f32 %v286, %v281
    %v290 = vmul.f32 %v286, %v282
    %v291 = vadd.f32 %v274, %v287
    %v292 = vadd.f32 %v275, %v288
    %v293 = vadd.f32 %v276, %v289
    %v294 = vadd.f32 %v277, %v290
    %s295 = scalar_lea.vmem [#allocation7], 96
    %v296 = vld [vmem:[%s295] sm:$0xff]
    %v297 = vld [vmem:[%s295 + $0x8] sm:$0xff]
    %v298 = vld [vmem:[%s295 + $0x10] sm:$0xff]
    %v299 = vld [vmem:[%s295 + $0x18] sm:$0xff]
    %v300 = vlaneseq
    %v301 = vshrl.u32 %v300, 7
    %v302 = vsub.s32 3, %v301
    %v303 = vrot.slane %v248, %v302
    %v304 = vmul.f32 %v303, %v296
    %v305 = vmul.f32 %v303, %v297
    %v306 = vmul.f32 %v303, %v298
    %v307 = vmul.f32 %v303, %v299
    %v308 = vadd.f32 %v291, %v304
    %v309 = vadd.f32 %v292, %v305
    %v310 = vadd.f32 %v293, %v306
    %v311 = vadd.f32 %v294, %v307
    %s312 = scalar_lea.vmem [#allocation7], 128
    %v313 = vld [vmem:[%s312] sm:$0xff]
    %v314 = vld [vmem:[%s312 + $0x8] sm:$0xff]
    %v315 = vld [vmem:[%s312 + $0x10] sm:$0xff]
    %v316 = vld [vmem:[%s312 + $0x18] sm:$0xff]
    %v317 = vlaneseq
    %v318 = vshrl.u32 %v317, 7
    %v319 = vsub.s32 4, %v318
    %v320 = vrot.slane %v248, %v319
    %v321 = vmul.f32 %v320, %v313
    %v322 = vmul.f32 %v320, %v314
    %v323 = vmul.f32 %v320, %v315
    %v324 = vmul.f32 %v320, %v316
    %v325 = vadd.f32 %v308, %v321
    %v326 = vadd.f32 %v309, %v322
    %v327 = vadd.f32 %v310, %v323
    %v328 = vadd.f32 %v311, %v324
    %s329 = scalar_lea.vmem [#allocation7], 160
    %v330 = vld [vmem:[%s329] sm:$0xff]
    %v331 = vld [vmem:[%s329 + $0x8] sm:$0xff]
    %v332 = vld [vmem:[%s329 + $0x10] sm:$0xff]
    %v333 = vld [vmem:[%s329 + $0x18] sm:$0xff]
    %v334 = vlaneseq
    %v335 = vshrl.u32 %v334, 7
    %v336 = vsub.s32 5, %v335
    %v337 = vrot.slane %v248, %v336
    %v338 = vmul.f32 %v337, %v330
    %v339 = vmul.f32 %v337, %v331
    %v340 = vmul.f32 %v337, %v332
    %v341 = vmul.f32 %v337, %v333
    %v342 = vadd.f32 %v325, %v338
    %v343 = vadd.f32 %v326, %v339
    %v344 = vadd.f32 %v327, %v340
    %v345 = vadd.f32 %v328, %v341
    %s346 = scalar_lea.vmem [#allocation7], 192
    %v347 = vld [vmem:[%s346] sm:$0xff]
    %v348 = vld [vmem:[%s346 + $0x8] sm:$0xff]
    %v349 = vld [vmem:[%s346 + $0x10] sm:$0xff]
    %v350 = vld [vmem:[%s346 + $0x18] sm:$0xff]
    %v351 = vlaneseq
    %v352 = vshrl.u32 %v351, 7
    %v353 = vsub.s32 6, %v352
    %v354 = vrot.slane %v248, %v353
    %v355 = vmul.f32 %v354, %v347
    %v356 = vmul.f32 %v354, %v348
    %v357 = vmul.f32 %v354, %v349
    %v358 = vmul.f32 %v354, %v350
    %v359 = vadd.f32 %v342, %v355
    %v360 = vadd.f32 %v343, %v356
    %v361 = vadd.f32 %v344, %v357
    %v362 = vadd.f32 %v345, %v358
    %s363 = scalar_lea.vmem [#allocation7], 224
    %v364 = vld [vmem:[%s363] sm:$0xff]
    %v365 = vld [vmem:[%s363 + $0x8] sm:$0xff]
    %v366 = vld [vmem:[%s363 + $0x10] sm:$0xff]
    %v367 = vld [vmem:[%s363 + $0x18] sm:$0xff]
    %v368 = vlaneseq
    %v369 = vshrl.u32 %v368, 7
    %v370 = vsub.s32 7, %v369
    %v371 = vrot.slane %v248, %v370
    %v372 = vmul.f32 %v371, %v364
    %v373 = vmul.f32 %v371, %v365
    %v374 = vmul.f32 %v371, %v366
    %v375 = vmul.f32 %v371, %v367
    %v376 = vadd.f32 %v359, %v372
    %v377 = vadd.f32 %v360, %v373
    %v378 = vadd.f32 %v361, %v374
    %v379 = vadd.f32 %v362, %v375
    %380 = vst [vmem:[#allocation8] sm:$0xff] %v376
    %381 = vst [vmem:[#allocation8 + $0x8] sm:$0xff] %v377
    %382 = vst [vmem:[#allocation8 + $0x10] sm:$0xff] %v378
    %383 = vst [vmem:[#allocation8 + $0x18] sm:$0xff] %v379
    // Predicated region
    $region26: #{tpu_custom_call.1} parent=1 // pred_check
      _
    $region27: #{tpu_custom_call.1} parent=1 // pred_check_branch
      %385 = sbr.rel (0) target = $region29
    $region28: #{tpu_custom_call.1} parent=1 // pred_region
      %s387 = ssub.s32 512, 512
      %388 = vsyncadd [#allocation4], %s387
      %s389 = sshll.u32 [#allocation8], 4
      %s390 = int_to_ptr.vmem [resolvable:$true] %s389
      %395 = dma.vmem_to_hbm [thread:$0]  %s390, 512, %s3, [#allocation4], 128, 128, 8
    $region29: #{tpu_custom_call.1} parent=1 // pred_fallthru
      _
    // Predicated region
    $region30: #{tpu_custom_call.1} parent=1 // pred_check
      _
    $region31: #{tpu_custom_call.1} parent=1 // pred_check_branch
      %397 = sbr.rel (0) target = $region33
    $region32: #{tpu_custom_call.1} parent=1 // pred_region
      %398 = dma.done [#allocation4], 512
    $region33: #{tpu_custom_call.1} parent=1 // pred_fallthru
      _
    %399 = vsyncpa [#allocation3], 1
    %400 = vsyncpa [#allocation6], 1
    %401 = vsyncpa [#allocation4], 1

</llo_original>
